<compile_context>
chip_gen: v7x
topology: tpu7x:2x2x1
jax: 0.10.0
libtpu: 0.0.40
codegen_flags: <defaults>
</compile_context>

<pallas_src>
import jax
import jax.numpy as jnp
from jax.experimental import pallas as pl
from jax.experimental.pallas import tpu as pltpu

EPS = 1e-07

_MAX_TILE_ROWS = 2048


def _tpu_generation():
    """Best-effort TPU generation from device_kind; 0 if unknown."""
    try:
        kind = jax.devices()[0].device_kind.lower()
    except Exception:
        return 0
    for gen in (7, 6, 5, 4):
        if str(gen) in kind:
            return gen
    return 0


def _block_budget_bytes(gen):
    """Per-input VMEM block budget, gated on chip generation."""
    if gen >= 7:
        return 8 * 1024 * 1024   # 3.2 TB/s HBM: big blocks; bump vmem limit below
    if gen == 6:
        return 4 * 1024 * 1024   # 2x2x4 MiB double-buffered fits 32 MiB scoped VMEM
    return 2 * 1024 * 1024       # v5e / unknown: stay well inside 16 MiB scoped VMEM


def _sublane_multiple(dtype):
    """Min legal row granularity for a (rows, C) block of this dtype."""
    itemsize = jnp.dtype(dtype).itemsize
    return max(8, 32 // itemsize)   # f32 -> 8, bf16 -> 16, int8/fp8 -> 32


def _pick_tile_rows(n_rows, chunk_size, dtype, gen):
    """Largest sublane-aligned row tile fitting the per-block VMEM budget."""
    itemsize = jnp.dtype(dtype).itemsize
    sub = _sublane_multiple(dtype)
    rows = _block_budget_bytes(gen) // max(1, chunk_size * itemsize)
    rows = max(sub, (rows // sub) * sub)
    rows = min(rows, _MAX_TILE_ROWS)
    if gen >= 7 and n_rows > sub:
        # Guarantee >= 2 grid steps so the parallel axis shards across both TCs.
        half = -(-n_rows // 2)            # ceil(R / 2)
        half = -(-half // sub) * sub      # round up to the sublane multiple
        rows = min(rows, half)
    if n_rows <= rows:
        return n_rows   # single block: block dims == array dims (always legal)
    return rows


def _make_kernel(total_rows, tile_r):
    def _cos_sdr_kernel(out_ref, trg_ref, loss_ref):
        # out_ref / trg_ref: (tile_r, chunk_size) VMEM tiles.
        # loss_ref:          (1, 1, tile_r) lane-dense output tile.
        o = out_ref[...].astype(jnp.float32)
        t = trg_ref[...].astype(jnp.float32)
        num = jnp.sum(t * o, axis=-1)                                  # (tile_r,)
        den = jnp.sqrt(jnp.sum(t * t, axis=-1)) * jnp.sqrt(jnp.sum(o * o, axis=-1))
        loss = -num / (den + EPS)        # keep torch EPS semantics exactly
        # Mask tail rows of a partial last tile in-kernel so garbage/NaN from
        # out-of-bounds reads never reaches the output buffer.
        row0 = pl.program_id(0) * tile_r
        lane = jax.lax.broadcasted_iota(jnp.int32, (1, 1, tile_r), 2)
        valid = (row0 + lane) < total_rows
        loss_ref[...] = jnp.where(valid, loss[None, None, :], 0.0)
    return _cos_sdr_kernel


def _per_chunk_loss(out2d, trg2d, tile_rows=None):
    """out2d, trg2d: [R, chunk_size] -> [R] per-chunk cosine-SDR loss."""
    R, C = out2d.shape
    gen = _tpu_generation()
    sub = _sublane_multiple(out2d.dtype)
    if tile_rows is None:
        tile_r = _pick_tile_rows(R, C, out2d.dtype, gen)
    else:
        tile_r = min(R, max(sub, (tile_rows // sub) * sub))
    num_tiles = pl.cdiv(R, tile_r)

    loss_tiles = pl.pallas_call(
        _make_kernel(R, tile_r),
        out_shape=jax.ShapeDtypeStruct((num_tiles, 1, tile_r), jnp.float32),
        grid_spec=pltpu.PrefetchScalarGridSpec(
            num_scalar_prefetch=0,
            grid=(num_tiles,),
            in_specs=[
                pl.BlockSpec((tile_r, C), lambda i: (i, 0)),
                pl.BlockSpec((tile_r, C), lambda i: (i, 0)),
            ],
            out_specs=pl.BlockSpec((1, 1, tile_r), lambda i: (i, 0, 0)),
        ),
        compiler_params=pltpu.CompilerParams(
            dimension_semantics=("parallel",),
            # Only needed for the big v7x blocks (2 inputs x 2 buffers x 8 MiB).
            vmem_limit_bytes=(48 << 20) if gen >= 7 else None,
        ),
    )(out2d, trg2d)

    # Tail rows are already zero-masked in-kernel; slice them off so they can
    # never enter the mean.
    return loss_tiles.reshape(num_tiles * tile_r)[:R]


def cos_sdr_loss(output, target, chunk_size=1024, out_dict=True, tile_rows=None):
    """JAX/Pallas equivalent of CosSDRLoss.forward (reduction = mean).

    bf16 inputs may be passed directly (kernel upcasts in-register), halving
    HBM traffic on this bandwidth-bound kernel.
    """
    B = output.shape[0]
    out2d = jnp.reshape(output, (-1, chunk_size))
    trg2d = jnp.reshape(target, (-1, chunk_size))
    n_chunks = out2d.shape[0] // B

    per_chunk = _per_chunk_loss(out2d, trg2d, tile_rows=tile_rows)
    per_chunk = per_chunk.reshape(B, n_chunks)

    loss_per_element = jnp.mean(per_chunk, axis=-1)  # mean over chunks, per batch
    loss = jnp.mean(loss_per_element)                # reduction = mean over batch
    return {'CosSDRLoss': loss} if out_dict else loss


def _reference(output, target, chunk_size=1024):
    B = output.shape[0]
    o = jnp.reshape(output, (B, -1, chunk_size)).astype(jnp.float32)
    t = jnp.reshape(target, (B, -1, chunk_size)).astype(jnp.float32)
    num = jnp.sum(t * o, axis=-1)
    den = jnp.linalg.norm(t, axis=-1) * jnp.linalg.norm(o, axis=-1)
    lpe = -num / (den + EPS)
    return jnp.mean(jnp.mean(lpe, axis=-1))


if __name__ == "__main__":
    key = jax.random.PRNGKey(0)
    k1, k2, k3, k4 = jax.random.split(key, 4)

    # Small shapes consistent with the module: B=2 waveforms, 4 chunks of 1024.
    B, T, CHUNK = 2, 4096, 1024
    output = jax.random.normal(k1, (B, T), dtype=jnp.float32)
    target = jax.random.normal(k2, (B, T), dtype=jnp.float32)

    result = cos_sdr_loss(output, target, chunk_size=CHUNK)
    loss = jax.block_until_ready(result['CosSDRLoss'])
    ref = jax.block_until_ready(_reference(output, target, chunk_size=CHUNK))
    assert jnp.allclose(loss, ref, atol=1e-5, rtol=1e-5), (loss, ref)

    # Multi-tile + partial-tail path (R = 15 chunk rows, 8-row tiles, masked tail).
    B2, T2 = 3, 5 * CHUNK
    output2 = jax.random.normal(k3, (B2, T2), dtype=jnp.float32)
    target2 = jax.random.normal(k4, (B2, T2), dtype=jnp.float32)
    loss2 = jax.block_until_ready(
        cos_sdr_loss(output2, target2, chunk_size=CHUNK, tile_rows=8)['CosSDRLoss'])
    ref2 = jax.block_until_ready(_reference(output2, target2, chunk_size=CHUNK))
    assert jnp.allclose(loss2, ref2, atol=1e-5, rtol=1e-5), (loss2, ref2)

    # bf16 fast path with the dtype-aware (16-row) sublane rounding.
    B3, T3 = 4, 16 * CHUNK
    output3 = jax.random.normal(k1, (B3, T3), dtype=jnp.float32).astype(jnp.bfloat16)
    target3 = jax.random.normal(k2, (B3, T3), dtype=jnp.float32).astype(jnp.bfloat16)
    loss3 = jax.block_until_ready(
        cos_sdr_loss(output3, target3, chunk_size=CHUNK, tile_rows=16)['CosSDRLoss'])
    ref3 = jax.block_until_ready(_reference(output3, target3, chunk_size=CHUNK))
    assert jnp.allclose(loss3, ref3, atol=1e-4, rtol=1e-4), (loss3, ref3)

    print("KERNEL_OK")
</pallas_src>

<mosaic_0001>
module attributes {stable_mosaic.version = 11 : i64} {
  func.func @_cos_sdr_kernel(%arg0: i32, %arg1: memref<8x1024xf32, #tpu.memory_space<vmem>>, %arg2: memref<8x1024xf32, #tpu.memory_space<vmem>>, %arg3: memref<1x1x8xf32, #tpu.memory_space<vmem>>) attributes {dimension_semantics = [#tpu.dimension_semantics<parallel>], iteration_bounds = array<i64: 1>, scalar_prefetch = 0 : i64, scratch_operands = 0 : i64, tpu.core_type = #tpu.core_type<tc>, window_params = [{transform_indices = @transform_0, window_bounds = array<i64: 8, 1024>}, {transform_indices = @transform_1, window_bounds = array<i64: 8, 1024>}, {transform_indices = @transform_2, window_bounds = array<i64: 1, 1, 8>}]} {
    %c0 = arith.constant 0 : index
    %c0_0 = arith.constant 0 : index
    %0 = vector.load %arg1[%c0, %c0_0] : memref<8x1024xf32, #tpu.memory_space<vmem>>, vector<8x1024xf32>
    %c0_1 = arith.constant 0 : index
    %c0_2 = arith.constant 0 : index
    %1 = vector.load %arg2[%c0_1, %c0_2] : memref<8x1024xf32, #tpu.memory_space<vmem>>, vector<8x1024xf32>
    %2 = arith.mulf %1, %0 : vector<8x1024xf32>
    %cst = arith.constant dense<0.000000e+00> : vector<8xf32>
    %3 = vector.multi_reduction <add>, %2, %cst [1] : vector<8x1024xf32> to vector<8xf32>
    %4 = arith.mulf %1, %1 : vector<8x1024xf32>
    %cst_3 = arith.constant dense<0.000000e+00> : vector<8xf32>
    %5 = vector.multi_reduction <add>, %4, %cst_3 [1] : vector<8x1024xf32> to vector<8xf32>
    %6 = math.sqrt %5 : vector<8xf32>
    %7 = arith.mulf %0, %0 : vector<8x1024xf32>
    %cst_4 = arith.constant dense<0.000000e+00> : vector<8xf32>
    %8 = vector.multi_reduction <add>, %7, %cst_4 [1] : vector<8x1024xf32> to vector<8xf32>
    %9 = math.sqrt %8 : vector<8xf32>
    %10 = arith.mulf %6, %9 : vector<8xf32>
    %cst_5 = arith.constant 0.000000e+00 : f32
    %11 = vector.broadcast %cst_5 : f32 to vector<8xf32>
    %12 = arith.subf %11, %3 : vector<8xf32>
    %cst_6 = arith.constant 1.000000e-07 : f32
    %13 = vector.broadcast %cst_6 : f32 to vector<8xf32>
    %14 = arith.addf %10, %13 : vector<8xf32>
    %15 = arith.divf %12, %14 : vector<8xf32>
    %c8_i32 = arith.constant 8 : i32
    %16 = arith.muli %arg0, %c8_i32 : i32
    %17 = tpu.iota {dimensions = array<i32: 2>} : vector<1x1x8xi32>
    %18 = vector.broadcast %16 : i32 to vector<1x1x8xi32>
    %19 = arith.addi %18, %17 : vector<1x1x8xi32>
    %c8_i32_7 = arith.constant 8 : i32
    %20 = vector.broadcast %c8_i32_7 : i32 to vector<1x1x8xi32>
    %21 = arith.cmpi slt, %19, %20 : vector<1x1x8xi32>
    %22 = vector.shape_cast %15 : vector<8xf32> to vector<1x1x8xf32>
    %cst_8 = arith.constant 0.000000e+00 : f32
    %23 = vector.broadcast %cst_8 : f32 to vector<1x1x8xf32>
    %24 = arith.select %21, %22, %23 : vector<1x1x8xi1>, vector<1x1x8xf32>
    %c0_9 = arith.constant 0 : index
    %c0_10 = arith.constant 0 : index
    %c0_11 = arith.constant 0 : index
    %25 = vector.load %arg3[%c0_9, %c0_10, %c0_11] : memref<1x1x8xf32, #tpu.memory_space<vmem>>, vector<1x1x8xf32>
    tpu.vector_store %arg3[%c0_9, %c0_10, %c0_11], %24 {strides = array<i32>} : memref<1x1x8xf32, #tpu.memory_space<vmem>>, vector<1x1x8xf32>,
    return
  }
  func.func @transform_0(%arg0: i32) -> (i32, i32) {
    %c0_i32 = arith.constant 0 : i32
    %c0_i32_0 = arith.constant 0 : i32
    return %arg0, %c0_i32 : i32, i32
  }
  func.func @transform_1(%arg0: i32) -> (i32, i32) {
    %c0_i32 = arith.constant 0 : i32
    %c0_i32_0 = arith.constant 0 : i32
    return %arg0, %c0_i32 : i32, i32
  }
  func.func @transform_2(%arg0: i32) -> (i32, i32, i32) {
    %c0_i32 = arith.constant 0 : i32
    %c0_i32_0 = arith.constant 0 : i32
    %c0_i32_1 = arith.constant 0 : i32
    return %arg0, %c0_i32, %c0_i32_0 : i32, i32, i32
  }
}

</mosaic_0001>

<llo_original>
// kernel: tpu_custom_call.1
$region0: #{tpu_custom_call.1}
  #allocation0 [shape = 'u32[]', space=smem, size = 0x4, offset = 0x4, fixed_abs, tag = 'smem constant byte address 0x4 - core index']
  #allocation1 [shape = 'u32[144,128]{1,0:T(1,128)}', space=vmem, size = 0x12000, scoped, tag = 'internal scratch']
  %s0 = inlined_call_operand.hbm [shape: f32[8,1024], index: 0, kind: input, shape index: {}]
  %s1 = inlined_call_operand.hbm [shape: f32[8,1024], index: 1, kind: input, shape index: {}]
  %s2 = inlined_call_operand.hbm [shape: f32[1,1,8], index: 2, kind: output, shape index: {}]
  %s3 = sld [smem:[#allocation0]]
  $region26: #{tpu_custom_call.1} parent=0
    _
  %s5 = ssub.s32 1, %s3
  %s6 = scalar_select 0, %s5, %s3
  $region1: #{tpu_custom_call.1} parent=0
    #allocation2 [shape = 'u8[32768]{0}', space=vmem, size = 0x8000, scoped, tag = 'input window, operand 0, single buffered']
    #allocation3 [shape = 's32[1]{0}', space=sflag, size = 0x4, scoped, tag = 'scoped memory for tpu_custom_call.1']
    #allocation4 [shape = 's32[1]{0}', space=sflag, size = 0x4, scoped, tag = 'scoped memory for tpu_custom_call.1']
    #allocation5 [shape = 'u8[32768]{0}', space=vmem, size = 0x8000, scoped, tag = 'input window, operand 1, single buffered']
    #allocation6 [shape = 's32[1]{0}', space=sflag, size = 0x4, scoped, tag = 'scoped memory for tpu_custom_call.1']
    #allocation7 [shape = 'u8[512]{0}', space=vmem, size = 0x400, scoped, tag = 'output window, operand 0, single buffered']
    %7 = vsyncpa [#allocation3], 0
    %8 = vsyncpa [#allocation6], 0
    %9 = vsyncpa [#allocation4], 0
    // Predicated region
    $region2: #{tpu_custom_call.1} parent=1 // pred_check
      _
    $region3: #{tpu_custom_call.1} parent=1 // pred_check_branch
      %11 = sbr.rel (0) target = $region5
    $region4: #{tpu_custom_call.1} parent=1 // pred_region
      %s13 = ssub.s32 1024, 1024
      %14 = vsyncadd [#allocation3], %s13
      %s16 = sshll.u32 [#allocation2], 4
      %s17 = int_to_ptr.vmem [resolvable:$true] %s16
      %19 = dma.hbm_to_vmem [thread:$0]  %s0, 1024, %s17, [#allocation3]
    $region5: #{tpu_custom_call.1} parent=1 // pred_fallthru
      _
    // Predicated region
    $region6: #{tpu_custom_call.1} parent=1 // pred_check
      _
    $region7: #{tpu_custom_call.1} parent=1 // pred_check_branch
      %21 = sbr.rel (0) target = $region9
    $region8: #{tpu_custom_call.1} parent=1 // pred_region
      %s23 = ssub.s32 1024, 1024
      %24 = vsyncadd [#allocation6], %s23
      %s26 = sshll.u32 [#allocation5], 4
      %s27 = int_to_ptr.vmem [resolvable:$true] %s26
      %29 = dma.hbm_to_vmem [thread:$0]  %s1, 1024, %s27, [#allocation6]
    $region9: #{tpu_custom_call.1} parent=1 // pred_fallthru
      _
    // Predicated region
    $region10: #{tpu_custom_call.1} parent=1 // pred_check
      _
    $region11: #{tpu_custom_call.1} parent=1 // pred_check_branch
      %31 = sbr.rel (0) target = $region13
    $region12: #{tpu_custom_call.1} parent=1 // pred_region
      %32 = dma.done [#allocation3], 1024
    $region13: #{tpu_custom_call.1} parent=1 // pred_fallthru
      _
    // Predicated region
    $region14: #{tpu_custom_call.1} parent=1 // pred_check
      _
    $region15: #{tpu_custom_call.1} parent=1 // pred_check_branch
      %34 = sbr.rel (0) target = $region17
    $region16: #{tpu_custom_call.1} parent=1 // pred_region
      %35 = dma.done [#allocation6], 1024
    $region17: #{tpu_custom_call.1} parent=1 // pred_fallthru
      _
    %v36 = vld [vmem:[#allocation2] sm:$0xff]
    %v37 = vld [vmem:[#allocation2 + $0x8] sm:$0xff]
    %v38 = vld [vmem:[#allocation2 + $0x10] sm:$0xff]
    %v39 = vld [vmem:[#allocation2 + $0x18] sm:$0xff]
    %v40 = vld [vmem:[#allocation2 + $0x20] sm:$0xff]
    %v41 = vld [vmem:[#allocation2 + $0x28] sm:$0xff]
    %v42 = vld [vmem:[#allocation2 + $0x30] sm:$0xff]
    %v43 = vld [vmem:[#allocation2 + $0x38] sm:$0xff]
    %v44 = vld [vmem:[#allocation5] sm:$0xff]
    %v45 = vld [vmem:[#allocation5 + $0x8] sm:$0xff]
    %v46 = vld [vmem:[#allocation5 + $0x10] sm:$0xff]
    %v47 = vld [vmem:[#allocation5 + $0x18] sm:$0xff]
    %v48 = vld [vmem:[#allocation5 + $0x20] sm:$0xff]
    %v49 = vld [vmem:[#allocation5 + $0x28] sm:$0xff]
    %v50 = vld [vmem:[#allocation5 + $0x30] sm:$0xff]
    %v51 = vld [vmem:[#allocation5 + $0x38] sm:$0xff]
    %v52 = vmul.f32 %v44, %v36
    %v53 = vmul.f32 %v45, %v37
    %v54 = vmul.f32 %v46, %v38
    %v55 = vmul.f32 %v47, %v39
    %v56 = vmul.f32 %v48, %v40
    %v57 = vmul.f32 %v49, %v41
    %v58 = vmul.f32 %v50, %v42
    %v59 = vmul.f32 %v51, %v43
    %v60 = vadd.f32 %v52, %v53
    %v61 = vadd.f32 %v60, %v54
    %v62 = vadd.f32 %v61, %v55
    %v63 = vadd.f32 %v62, %v56
    %v64 = vadd.f32 %v63, %v57
    %v65 = vadd.f32 %v64, %v58
    %v66 = vadd.f32 %v65, %v59
    %67 = vadd.xlane.f32.xlu0 %v66
    %v68 = vpop.xlane.xlu0 %67
    %v69 = vmul.f32 %v44, %v44
    %v70 = vmul.f32 %v45, %v45
    %v71 = vmul.f32 %v46, %v46
    %v72 = vmul.f32 %v47, %v47
    %v73 = vmul.f32 %v48, %v48
    %v74 = vmul.f32 %v49, %v49
    %v75 = vmul.f32 %v50, %v50
    %v76 = vmul.f32 %v51, %v51
    %v77 = vadd.f32 %v69, %v70
    %v78 = vadd.f32 %v77, %v71
    %v79 = vadd.f32 %v78, %v72
    %v80 = vadd.f32 %v79, %v73
    %v81 = vadd.f32 %v80, %v74
    %v82 = vadd.f32 %v81, %v75
    %v83 = vadd.f32 %v82, %v76
    %84 = vadd.xlane.f32.xlu0 %v83
    %v85 = vpop.xlane.xlu0 %84
    %v86 = vrsqrt.pop %v85
    %v87 = vmul.f32 %v85, %v86
    %vm88 = vcmp.eq.f32.partialorder %v85, inf
    %v89 = vsel %vm88, %v85, %v87
    %vm90 = vcmp.eq.f32.partialorder %v85, 0.0
    %v91 = vand.u32 %v85, 2147483648
    %v92 = vsel %vm90, %v91, %v89
    %v93 = vmul.f32 %v36, %v36
    %v94 = vmul.f32 %v37, %v37
    %v95 = vmul.f32 %v38, %v38
    %v96 = vmul.f32 %v39, %v39
    %v97 = vmul.f32 %v40, %v40
    %v98 = vmul.f32 %v41, %v41
    %v99 = vmul.f32 %v42, %v42
    %v100 = vmul.f32 %v43, %v43
    %v101 = vadd.f32 %v93, %v94
    %v102 = vadd.f32 %v101, %v95
    %v103 = vadd.f32 %v102, %v96
    %v104 = vadd.f32 %v103, %v97
    %v105 = vadd.f32 %v104, %v98
    %v106 = vadd.f32 %v105, %v99
    %v107 = vadd.f32 %v106, %v100
    %108 = vadd.xlane.f32.xlu0 %v107
    %v109 = vpop.xlane.xlu0 %108
    %v110 = vrsqrt.pop %v109
    %v111 = vmul.f32 %v109, %v110
    %vm112 = vcmp.eq.f32.partialorder %v109, inf
    %v113 = vsel %vm112, %v109, %v111
    %vm114 = vcmp.eq.f32.partialorder %v109, 0.0
    %v115 = vand.u32 %v109, 2147483648
    %v116 = vsel %vm114, %v115, %v113
    %v117 = vmul.f32 %v92, %v116
    %v118 = vsub.f32 0.0, %v68
    %v119 = vadd.f32 %v117, 1e-07
    %v120 = vrcp.pop %v119
    %v121 = vmul.f32 %v118, %v120
    %s122 = smul.u32 0, 8
    %v123 = vlaneseq
    %v124 = vand.u32 %v123, 127
    %v125 = vstv %s122
    %v126 = vadd.s32 %v125, %v124
    %vm127 = vcmp.lt.s32.totalorder %v126, 8
    %v129 = vlaneseq
    %v130 = vshrl.u32 %v129, 7
    %v131 = vsub.s32 %v124, %v130
    %v132 = vrot.slane %v121, %v131
    %v134 = vsel %vm127, %v132, 0.0
    %vm135 = vcmask 57344
    %136 = vst.msk [vmem:[#allocation7] sm:$0x1] %vm135, %v134
    // Predicated region
    $region18: #{tpu_custom_call.1} parent=1 // pred_check
      _
    $region19: #{tpu_custom_call.1} parent=1 // pred_check_branch
      %138 = sbr.rel (0) target = $region21
    $region20: #{tpu_custom_call.1} parent=1 // pred_region
      %s140 = ssub.s32 16, 16
      %141 = vsyncadd [#allocation4], %s140
      %s143 = sshll.u32 [#allocation7], 4
      %s144 = int_to_ptr.vmem [resolvable:$true] %s143
      %146 = dma.vmem_to_hbm [thread:$0]  %s144, 16, %s2, [#allocation4]
    $region21: #{tpu_custom_call.1} parent=1 // pred_fallthru
      _
    // Predicated region
    $region22: #{tpu_custom_call.1} parent=1 // pred_check
      _
    $region23: #{tpu_custom_call.1} parent=1 // pred_check_branch
      %148 = sbr.rel (0) target = $region25
    $region24: #{tpu_custom_call.1} parent=1 // pred_region
      %149 = dma.done [#allocation4], 16
    $region25: #{tpu_custom_call.1} parent=1 // pred_fallthru
      _
    %150 = vsyncpa [#allocation3], 1
    %151 = vsyncpa [#allocation6], 1
    %152 = vsyncpa [#allocation4], 1

</llo_original>
